<compile_context>
chip_gen: v5e
topology: v5e:2x2
jax: 0.10.0
libtpu: 0.0.40
codegen_flags: <defaults>
</compile_context>

<pallas_src>
import functools

import jax
import jax.numpy as jnp
from jax.experimental import pallas as pl
from jax.experimental.pallas import tpu as pltpu


def _round_up(x: int, m: int) -> int:
    return ((x + m - 1) // m) * m


def _lstm_gate_kernel(x_ref, w_ref, b_ref, out_ref, *, tn: int):
    """x_ref: (tm, K) bf16, w_ref: (K, 3*tn) bf16, b_ref: (1, 3*tn) f32, out_ref: (tm, tn) f32.

    Weight lanes within a hidden tile are packed [input | cell-candidate | output];
    the forget gate is stripped on the host (it multiplies c0 == 0).
    """
    # Single fused MXU call for all three live gates, f32 accumulation.
    g = jnp.dot(x_ref[...], w_ref[...], preferred_element_type=jnp.float32)
    g = g + b_ref[...]

    # tn is a multiple of 128 -> these slices are lane-aligned (no relayout).
    gi = g[:, 0 * tn:1 * tn]
    gg = g[:, 1 * tn:2 * tn]
    go = g[:, 2 * tn:3 * tn]

    i_g = jax.nn.sigmoid(gi)          # input gate
    g_g = jnp.tanh(gg)                # cell candidate
    o_g = jax.nn.sigmoid(go)          # output gate

    c_new = i_g * g_g                 # f * c0 == 0 since c0 == 0
    h_new = o_g * jnp.tanh(c_new)
    out_ref[...] = jnp.maximum(h_new, 0.0).astype(out_ref.dtype)   # nn.ReLU()


def make_lstm_cell_forward(w_ih, w_hh, b_ih, b_hh, out_dim):
    """One-time parameter prep (strip forget gate, transpose, fuse biases, bf16 cast,
    per-tile [i|g|o] lane packing) + a jitted per-call forward.

    w_ih: (4*out_dim, in_dims), w_hh: (4*out_dim, out_dim)  (w_hh unused: h0 == 0)
    b_ih, b_hh: (4*out_dim,)
    Returns: forward(x: (B, in_dims)) -> (B, out_dim) float32

    NOTE: valid only under the module's contract h0 == c0 == 0 (fresh zero states every
    call); do not reuse for a stateful LSTM step.
    """
    del w_hh  # h0 == 0 -> W_hh @ h0 == 0
    H = out_dim
    in_dims = w_ih.shape[1]

    # Lane padding: pad H only to a multiple of 128, then pick tn as a 128-multiple
    # divisor of H_pad (<= 512), keeping the double-buffered bf16 weight block <= 24 MiB.
    H_pad = _round_up(H, 128)
    k128 = H_pad // 128
    w_block_budget = 24 * 1024 * 1024
    tn = 128
    for d in (4, 3, 2):
        if k128 % d == 0 and in_dims * 3 * (128 * d) * 2 * 2 <= w_block_budget:
            tn = 128 * d
            break
    n_tiles = H_pad // tn

    # Gate blocks [i, g, o] = rows [0:H], [2H:3H], [3H:4H] of torch's [i, f, g, o] layout,
    # transposed to (K, H) and zero-padded along lanes to H_pad.
    def _pad_w(rows):  # (H, K) -> (K, H_pad)
        return jnp.pad(rows.T, ((0, 0), (0, H_pad - H)))

    w3 = jnp.stack([_pad_w(w_ih[0:H]),
                    _pad_w(w_ih[2 * H:3 * H]),
                    _pad_w(w_ih[3 * H:4 * H])])              # (3, K, H_pad)
    # Re-pack so each hidden tile t of width 3*tn holds [i_t | g_t | o_t] contiguously.
    w_packed = (w3.reshape(3, in_dims, n_tiles, tn)
                  .transpose(1, 2, 0, 3)
                  .reshape(in_dims, n_tiles * 3 * tn)
                  .astype(jnp.bfloat16))                     # (K, 3*H_pad) bf16

    b_full = b_ih + b_hh
    def _pad_b(v):
        return jnp.pad(v, (0, H_pad - H))

    b3 = jnp.stack([_pad_b(b_full[0:H]),
                    _pad_b(b_full[2 * H:3 * H]),
                    _pad_b(b_full[3 * H:4 * H])])            # (3, H_pad)
    b_packed = (b3.reshape(3, n_tiles, tn)
                  .transpose(1, 0, 2)
                  .reshape(1, n_tiles * 3 * tn)
                  .astype(jnp.float32))                      # (1, 3*H_pad) f32

    @jax.jit
    def _forward(x, w_p, b_p):
        B, K = x.shape
        # Batch tiling: single padded-to-8 tile for small batches, 128-row tiles for
        # large batches (bounds dead-row padding at < 128 rows).
        B8 = _round_up(B, 8)
        if B8 <= 256:
            tm, B_pad = B8, B8
        else:
            tm, B_pad = 128, _round_up(B, 128)

        x_p = jnp.pad(x, ((0, B_pad - B), (0, 0))) if B_pad != B else x
        x_p = x_p.astype(jnp.bfloat16)

        # Hidden axis OUTERMOST: each weight/bias block is fetched once and reused for
        # every batch tile (weights are the dominant HBM traffic).
        grid = (H_pad // tn, B_pad // tm)

        cost = pl.CostEstimate(
            flops=2 * B_pad * K * 3 * H_pad,
            transcendentals=4 * B_pad * H_pad,
            bytes_accessed=(B_pad * K * 2            # x (bf16)
                            + K * 3 * H_pad * 2      # weights (bf16)
                            + 3 * H_pad * 4          # bias (f32)
                            + B_pad * H_pad * 4),    # output (f32)
        )

        out = pl.pallas_call(
            functools.partial(_lstm_gate_kernel, tn=tn),
            out_shape=jax.ShapeDtypeStruct((B_pad, H_pad), jnp.float32),
            grid=grid,
            in_specs=[
                pl.BlockSpec((tm, K), lambda n, m: (m, 0)),
                pl.BlockSpec((K, 3 * tn), lambda n, m: (0, n)),
                pl.BlockSpec((1, 3 * tn), lambda n, m: (0, n)),
            ],
            out_specs=pl.BlockSpec((tm, tn), lambda n, m: (m, n)),
            compiler_params=pltpu.CompilerParams(
                dimension_semantics=("parallel", "parallel"),
                vmem_limit_bytes=32 * 1024 * 1024,
            ),
            cost_estimate=cost,
        )(x_p, w_p, b_p)

        if B_pad != B or H_pad != H:
            out = out[:B, :H]
        return out

    return lambda x: _forward(x, w_packed, b_packed)


if __name__ == "__main__":
    # Small shapes consistent with the module: x is (batch, in_dims).
    B, IN_DIMS, OUT_DIM = 8, 16, 32

    key = jax.random.PRNGKey(0)
    kx, kwi, kwh, kbi, kbh = jax.random.split(key, 5)

    # Deterministic parameter init, mirroring nn.LSTMCell's U(-1/sqrt(H), 1/sqrt(H)).
    bound = 1.0 / (OUT_DIM ** 0.5)
    w_ih = jax.random.uniform(kwi, (4 * OUT_DIM, IN_DIMS), jnp.float32, -bound, bound)
    w_hh = jax.random.uniform(kwh, (4 * OUT_DIM, OUT_DIM), jnp.float32, -bound, bound)
    b_ih = jax.random.uniform(kbi, (4 * OUT_DIM,), jnp.float32, -bound, bound)
    b_hh = jax.random.uniform(kbh, (4 * OUT_DIM,), jnp.float32, -bound, bound)

    x = jax.random.normal(kx, (B, IN_DIMS), jnp.float32)

    lstm_forward = make_lstm_cell_forward(w_ih, w_hh, b_ih, b_hh, OUT_DIM)
    out = lstm_forward(x)
    jax.block_until_ready(out)

    # Pure-JAX f32 reference: exact torch.nn.LSTMCell math with h0 == c0 == 0 + ReLU.
    gates = x @ w_ih.T + (b_ih + b_hh)[None, :]
    i_g = jax.nn.sigmoid(gates[:, 0 * OUT_DIM:1 * OUT_DIM])
    f_g = jax.nn.sigmoid(gates[:, 1 * OUT_DIM:2 * OUT_DIM])
    g_g = jnp.tanh(gates[:, 2 * OUT_DIM:3 * OUT_DIM])
    o_g = jax.nn.sigmoid(gates[:, 3 * OUT_DIM:4 * OUT_DIM])
    c_ref = f_g * 0.0 + i_g * g_g
    ref = jnp.maximum(o_g * jnp.tanh(c_ref), 0.0)

    assert out.shape == (B, OUT_DIM)
    # bf16 weights/activations with f32 accumulation -> loosened tolerance vs f32 ref.
    assert jnp.allclose(out, ref, atol=2e-2, rtol=2e-2), float(jnp.max(jnp.abs(out - ref)))

    print("KERNEL_OK")
</pallas_src>

<mosaic_0001>
module attributes {stable_mosaic.version = 11 : i64} {
  func.func @_lstm_gate_kernel(%arg0: i32, %arg1: i32, %arg2: memref<8x16xbf16, #tpu.memory_space<vmem>>, %arg3: memref<16x384xbf16, #tpu.memory_space<vmem>>, %arg4: memref<1x384xf32, #tpu.memory_space<vmem>>, %arg5: memref<8x128xf32, #tpu.memory_space<vmem>>) attributes {dimension_semantics = [#tpu.dimension_semantics<parallel>, #tpu.dimension_semantics<parallel>], iteration_bounds = array<i64: 1, 1>, scalar_prefetch = 0 : i64, scratch_operands = 0 : i64, tpu.core_type = #tpu.core_type<tc>, window_params = [{transform_indices = @transform_0, window_bounds = array<i64: 8, 16>}, {transform_indices = @transform_1, window_bounds = array<i64: 16, 384>}, {transform_indices = @transform_2, window_bounds = array<i64: 1, 384>}, {transform_indices = @transform_3, window_bounds = array<i64: 8, 128>}]} {
    %c0 = arith.constant 0 : index
    %c0_0 = arith.constant 0 : index
    %0 = vector.load %arg2[%c0, %c0_0] : memref<8x16xbf16, #tpu.memory_space<vmem>>, vector<8x16xbf16>
    %c0_1 = arith.constant 0 : index
    %c0_2 = arith.constant 0 : index
    %1 = vector.load %arg3[%c0_1, %c0_2] : memref<16x384xbf16, #tpu.memory_space<vmem>>, vector<16x384xbf16>
    %cst = arith.constant dense<0.000000e+00> : vector<8x384xf32>
    %2 = tpu.matmul %0, %1, %cst {dimension_numbers = #tpu.dot_dimension_numbers<[1], [0], [0], [1], [0, 0, 1, 1], [], []>} : vector<8x16xbf16>, vector<16x384xbf16>, vector<8x384xf32> -> vector<8x384xf32>
    %c0_3 = arith.constant 0 : index
    %c0_4 = arith.constant 0 : index
    %3 = vector.load %arg4[%c0_3, %c0_4] : memref<1x384xf32, #tpu.memory_space<vmem>>, vector<1x384xf32>
    %4 = vector.broadcast %3 : vector<1x384xf32> to vector<8x384xf32>
    %5 = arith.addf %2, %4 : vector<8x384xf32>
    %6 = vector.extract_strided_slice %5 {offsets = [0, 0], sizes = [8, 128], strides = [1, 1]} : vector<8x384xf32> to vector<8x128xf32>
    %7 = vector.extract_strided_slice %5 {offsets = [0, 128], sizes = [8, 128], strides = [1, 1]} : vector<8x384xf32> to vector<8x128xf32>
    %8 = vector.extract_strided_slice %5 {offsets = [0, 256], sizes = [8, 128], strides = [1, 1]} : vector<8x384xf32> to vector<8x128xf32>
    %9 = arith.negf %6 : vector<8x128xf32>
    %10 = math.exp %9 : vector<8x128xf32>
    %cst_5 = arith.constant 1.000000e+00 : f32
    %11 = vector.broadcast %cst_5 : f32 to vector<8x128xf32>
    %12 = arith.addf %11, %10 : vector<8x128xf32>
    %13 = arith.divf %11, %12 : vector<8x128xf32>
    %14 = math.tanh %7 : vector<8x128xf32>
    %15 = arith.negf %8 : vector<8x128xf32>
    %16 = math.exp %15 : vector<8x128xf32>
    %cst_6 = arith.constant 1.000000e+00 : f32
    %17 = vector.broadcast %cst_6 : f32 to vector<8x128xf32>
    %18 = arith.addf %17, %16 : vector<8x128xf32>
    %19 = arith.divf %17, %18 : vector<8x128xf32>
    %20 = arith.mulf %13, %14 : vector<8x128xf32>
    %21 = math.tanh %20 : vector<8x128xf32>
    %22 = arith.mulf %19, %21 : vector<8x128xf32>
    %cst_7 = arith.constant 0.000000e+00 : f32
    %23 = vector.broadcast %cst_7 : f32 to vector<8x128xf32>
    %24 = arith.maximumf %22, %23 : vector<8x128xf32>
    %c0_8 = arith.constant 0 : index
    %c0_9 = arith.constant 0 : index
    %25 = vector.load %arg5[%c0_8, %c0_9] : memref<8x128xf32, #tpu.memory_space<vmem>>, vector<8x128xf32>
    tpu.vector_store %arg5[%c0_8, %c0_9], %24 {strides = array<i32>} : memref<8x128xf32, #tpu.memory_space<vmem>>, vector<8x128xf32>,
    return
  }
  func.func @transform_0(%arg0: i32, %arg1: i32) -> (i32, i32) {
    %c0_i32 = arith.constant 0 : i32
    %c0_i32_0 = arith.constant 0 : i32
    return %arg1, %c0_i32 : i32, i32
  }
  func.func @transform_1(%arg0: i32, %arg1: i32) -> (i32, i32) {
    %c0_i32 = arith.constant 0 : i32
    %c0_i32_0 = arith.constant 0 : i32
    return %c0_i32, %arg0 : i32, i32
  }
  func.func @transform_2(%arg0: i32, %arg1: i32) -> (i32, i32) {
    %c0_i32 = arith.constant 0 : i32
    %c0_i32_0 = arith.constant 0 : i32
    return %c0_i32, %arg0 : i32, i32
  }
  func.func @transform_3(%arg0: i32, %arg1: i32) -> (i32, i32) {
    %c0_i32 = arith.constant 0 : i32
    return %arg1, %arg0 : i32, i32
  }
}

</mosaic_0001>

<llo_original>
// kernel: _forward.1
$region0: #{_forward.1}
  #allocation0 [shape = 'u32[]', space=smem, size = 0x4, offset = 0x4, fixed_abs, tag = 'smem constant byte address 0x4 - core index']
  #allocation1 [shape = 'u32[72,128]{1,0:T(1,128)}', space=vmem, size = 0x9000, scoped, tag = 'internal scratch']
  %s0 = inlined_call_operand.vmem [shape: bf16[8,16], index: 0, kind: input, shape index: {}]
  %s1 = inlined_call_operand.hbm [shape: bf16[16,384], index: 1, kind: input, shape index: {}]
  %s2 = inlined_call_operand.vmem [shape: f32[1,384], index: 2, kind: input, shape index: {}]
  %s3 = inlined_call_operand.hbm [shape: f32[8,128], index: 3, kind: output, shape index: {}]
  %s4 = sld [smem:[#allocation0]]
  $region26: #{_forward.1} parent=0
    _
  %s6 = ssub.s32 1, %s4
  %s7 = scalar_select 0, %s6, %s4
  $region1: #{_forward.1} parent=0
    #allocation2 [shape = 'u8[12288]{0}', space=vmem, size = 0x3000, scoped, tag = 'input window, operand 1, single buffered']
    #allocation3 [shape = 's32[1]{0}', space=sflag, size = 0x4, scoped, tag = 'scoped memory for _forward.1']
    #allocation4 [shape = 's32[1]{0}', space=sflag, size = 0x4, scoped, tag = 'scoped memory for _forward.1']
    #allocation5 [shape = 'u8[4096]{0}', space=vmem, size = 0x1000, scoped, tag = 'output window, operand 0, single buffered']
    %8 = vsyncpa [#allocation3], 0
    %9 = vsyncpa [#allocation4], 0
    // Predicated region
    $region2: #{_forward.1} parent=1 // pred_check
      _
    $region3: #{_forward.1} parent=1 // pred_check_branch
      %11 = sbr.rel (0) target = $region5
    $region4: #{_forward.1} parent=1 // pred_region
      _
    $region5: #{_forward.1} parent=1 // pred_fallthru
      _
    // Predicated region
    $region6: #{_forward.1} parent=1 // pred_check
      _
    $region7: #{_forward.1} parent=1 // pred_check_branch
      %13 = sbr.rel (0) target = $region9
    $region8: #{_forward.1} parent=1 // pred_region
      %15 = vsyncadd [#allocation3], 0
      %s16 = sshll.u32 %s1, 4
      %s17 = int_to_ptr.hbm [resolvable:$true] %s16
      %s18 = sshll.u32 [#allocation2], 4
      %s19 = int_to_ptr.vmem [resolvable:$true] %s18
      %24 = dma.hbm_to_vmem [thread:$0]  %s17, 384, %s19, [#allocation3], 192, 192, 12
    $region9: #{_forward.1} parent=1 // pred_fallthru
      _
    // Predicated region
    $region10: #{_forward.1} parent=1 // pred_check
      _
    $region11: #{_forward.1} parent=1 // pred_check_branch
      %26 = sbr.rel (0) target = $region13
    $region12: #{_forward.1} parent=1 // pred_region
      _
    $region13: #{_forward.1} parent=1 // pred_fallthru
      _
    // Predicated region
    $region14: #{_forward.1} parent=1 // pred_check
      _
    $region15: #{_forward.1} parent=1 // pred_check_branch
      %28 = sbr.rel (0) target = $region17
    $region16: #{_forward.1} parent=1 // pred_region
      %30 = dma.done [#allocation3], 384
    $region17: #{_forward.1} parent=1 // pred_fallthru
      _
    %v32 = vld [vmem:[%s0] sm:$0xf]
    %v33 = vld [vmem:[#allocation2] sm:$0xff]
    %v34 = vld [vmem:[#allocation2 + $0x8] sm:$0xf]
    %v35 = vld [vmem:[#allocation2 + $0xc] sm:$0xff]
    %v36 = vld [vmem:[#allocation2 + $0x14] sm:$0xf]
    %v37 = vld [vmem:[%s2] sm:$0x7]
    %v39 = vperm.slane %v37, 0
    %v40 = vperm.slane %v37, 1
    %v41 = vperm.slane %v37, 2
    %v49 = vunpack.c.l.b16 %v33
    %v50 = vunpack.c.h.b16 %v33
    %v51 = vunpack.c.l.b16 %v34
    %v52 = vunpack.c.l.b16 %v35
    %v53 = vunpack.c.h.b16 %v35
    %v54 = vunpack.c.l.b16 %v36
    %v55 = vpack.c.b16 %v52, %v49
    %v56 = vpack.c.b16 %v53, %v50
    %v57 = vpack.c.b16 %v54, %v51
    %vm61 = vcmask 130048
    %v63 = vsel %vm61, %v32, 0
    %65 = vmatpush.bf16.msra.mxu0 0
    %66 = vmatpush.bf16.msra.mxu0 0
    %67 = vmatpush.bf16.msra.mxu0 0
    %68 = vmatpush.bf16.msra.mxu0 0
    %69 = vmatpush.bf16.msra.mxu0 0
    %70 = vmatpush.bf16.msra.mxu0 0
    %71 = vmatpush.bf16.msra.mxu0 0
    %72 = vmatpush.bf16.msra.mxu0 %v55
    %73 = vmatmul.bf16.gmra.mxu0 %v63
    %v74 = vpop.f32.mrf.mxu0
    %v75 = vadd.f32 %v39, %v74
    %v76 = vpop.f32.mrf.mxu0
    %77 = vdwg.mxu0
    %78 = vmatpush.bf16.msra.mxu0 0
    %79 = vmatpush.bf16.msra.mxu0 0
    %80 = vmatpush.bf16.msra.mxu0 0
    %81 = vmatpush.bf16.msra.mxu0 0
    %82 = vmatpush.bf16.msra.mxu0 0
    %83 = vmatpush.bf16.msra.mxu0 0
    %84 = vmatpush.bf16.msra.mxu0 0
    %85 = vmatpush.bf16.msra.mxu0 %v56
    %86 = vmatmul.bf16.gmra.mxu0 %v63
    %v87 = vpop.f32.mrf.mxu0
    %v88 = vadd.f32 %v40, %v87
    %v89 = vpop.f32.mrf.mxu0
    %90 = vdwg.mxu0
    %91 = vmatpush.bf16.msra.mxu0 0
    %92 = vmatpush.bf16.msra.mxu0 0
    %93 = vmatpush.bf16.msra.mxu0 0
    %94 = vmatpush.bf16.msra.mxu0 0
    %95 = vmatpush.bf16.msra.mxu0 0
    %96 = vmatpush.bf16.msra.mxu0 0
    %97 = vmatpush.bf16.msra.mxu0 0
    %98 = vmatpush.bf16.msra.mxu0 %v57
    %99 = vmatmul.bf16.gmra.mxu0 %v63
    %v100 = vpop.f32.mrf.mxu0
    %v101 = vadd.f32 %v41, %v100
    %v102 = vpop.f32.mrf.mxu0
    %103 = vdwg.mxu0
    %v104 = vxor.u32 %v75, 2147483648
    %v105 = vmul.f32 %v104, 1.442695
    %v106 = vpow.pop %v105
    %v107 = vadd.f32 %v106, 1.0
    %v108 = vrcp.pop %v107
    %v109 = vmul.f32 %v107, %v108
    %v110 = vsub.f32 1.0, %v109
    %v111 = vmul.f32 %v108, %v110
    %v112 = vadd.f32 %v108, %v111
    %vm113 = vweird.f32 %v107
    %vm114 = vweird.f32 %v108
    %vm115 = vmor %vm113, %vm114
    %v116 = vsel %vm115, %v108, %v112
    %v117 = vand.u32 2147483647, %v107
    %vm118 = vcmp.eq.f32.partialorder %v117, 8.507059e+37
    %v119 = vand.u32 %v107, 2147483648
    %v120 = vor.u32 1.1754944e-38, %v119
    %v121 = vsel %vm118, %v120, %v116
    %v122 = vmul.f32 1.0, %v121
    %v123 = vtanh.pop %v88
    %v124 = vxor.u32 %v101, 2147483648
    %v125 = vmul.f32 %v124, 1.442695
    %v126 = vpow.pop %v125
    %v127 = vadd.f32 %v126, 1.0
    %v128 = vrcp.pop %v127
    %v129 = vmul.f32 %v127, %v128
    %v130 = vsub.f32 1.0, %v129
    %v131 = vmul.f32 %v128, %v130
    %v132 = vadd.f32 %v128, %v131
    %vm133 = vweird.f32 %v127
    %vm134 = vweird.f32 %v128
    %vm135 = vmor %vm133, %vm134
    %v136 = vsel %vm135, %v128, %v132
    %v137 = vand.u32 2147483647, %v127
    %vm138 = vcmp.eq.f32.partialorder %v137, 8.507059e+37
    %v139 = vand.u32 %v127, 2147483648
    %v140 = vor.u32 1.1754944e-38, %v139
    %v141 = vsel %vm138, %v140, %v136
    %v142 = vmul.f32 1.0, %v141
    %v143 = vmul.f32 %v122, %v123
    %v144 = vtanh.pop %v143
    %v145 = vmul.f32 %v142, %v144
    %v146 = vmax.f32 %v145, 0.0
    %147 = vst [vmem:[#allocation5] sm:$0xff] %v146
    // Predicated region
    $region18: #{_forward.1} parent=1 // pred_check
      _
    $region19: #{_forward.1} parent=1 // pred_check_branch
      %149 = sbr.rel (0) target = $region21
    $region20: #{_forward.1} parent=1 // pred_region
      %151 = vsyncadd [#allocation4], 0
      %s153 = sshll.u32 [#allocation5], 4
      %s154 = int_to_ptr.vmem [resolvable:$true] %s153
      %s155 = sshll.u32 %s3, 4
      %s156 = int_to_ptr.hbm [resolvable:$true] %s155
      %158 = dma.vmem_to_hbm [thread:$0]  %s154, 128, %s156, [#allocation4]
    $region21: #{_forward.1} parent=1 // pred_fallthru
      _
    // Predicated region
    $region22: #{_forward.1} parent=1 // pred_check
      _
    $region23: #{_forward.1} parent=1 // pred_check_branch
      %160 = sbr.rel (0) target = $region25
    $region24: #{_forward.1} parent=1 // pred_region
      %162 = dma.done [#allocation4], 128
    $region25: #{_forward.1} parent=1 // pred_fallthru
      _
    %163 = vsyncpa [#allocation3], 1
    %164 = vsyncpa [#allocation4], 1

</llo_original>
